<compile_context>
chip_gen: v6e
topology: v6e:2x2x1
jax: 0.10.0
libtpu: 0.0.40
codegen_flags: <defaults>
</compile_context>

<pallas_src>
import functools

import jax
import jax.numpy as jnp
from jax.experimental import pallas as pl
from jax.experimental.pallas import tpu as pltpu


# ----------------------------------------------------------------------------
# Fused kernel: [optional TopK gather] + GATConv + ReLU + BatchNorm +
#               [TopK score pack | in-kernel TopK + global mean/max pool]
# Whole batch in one block, single grid step (latency-bound toy shapes).
# ----------------------------------------------------------------------------
def _gat_block_kernel(*refs, heads, fout, c_in, first_layer, has_gather,
                      is_last, last_pool_k):
    it = iter(refs)
    x_ref = next(it)
    idx_ref = gate_ref = None
    if has_gather:
        idx_ref = next(it)
        gate_ref = next(it)
    waug_ref = next(it)
    bias_ref = next(it)
    gamma_ref = next(it)
    beta_ref = next(it)
    p_ref = next(it)
    o_ref = next(it)

    H, F = heads, fout
    C = H * F

    x_full = x_ref[...]                                   # [B, N_in, slab_in]
    B, N_in, _ = x_full.shape

    # ---- fused TopK gather from previous layer (one-hot bf16 MXU matmul) ---
    if has_gather:
        M = idx_ref.shape[1]
        idx = idx_ref[...]                                 # [B, M] int32
        gate = gate_ref[...]                               # [B, M] tanh scores
        iota_n = jax.lax.broadcasted_iota(jnp.int32, (B, M, N_in), 2)
        onehot = (idx[:, :, None] == iota_n).astype(jnp.bfloat16)   # [B, M, N_in]
        x_feats = x_full[:, :, :c_in].astype(jnp.bfloat16)
        x = jnp.einsum('bmn,bnc->bmc', onehot, x_feats,
                       preferred_element_type=jnp.float32)          # gather
        x = x * gate[:, :, None]                           # TopKPooling gating
    else:
        M = N_in
        x = x_full[:, :, :c_in]                            # [B, M, c_in]

    # ---- fused projection + attention coefficients: [h | e] = x @ W_aug ----
    if first_layer:
        # c_in == 1: rank-1 projection -> VPU broadcast multiply, skip the MXU.
        he = x * waug_ref[...]                             # [B,M,1]*[1,C+2H]
    else:
        x_flat = x.reshape(B * M, c_in)
        he = jnp.dot(x_flat.astype(jnp.bfloat16),
                     waug_ref[...].astype(jnp.bfloat16),
                     preferred_element_type=jnp.float32).reshape(B, M, C + 2 * H)

    h = he[:, :, :C]                                       # [B, M, C]
    e = he[:, :, C:]                                       # [B, M, 2H]
    # One small XLU transpose for all heads: lane-dense e_src rows.
    e_src_t = jnp.swapaxes(e[:, :, :H], 1, 2)              # [B, H, M]

    head_outs = []
    for hd in range(H):
        e_dst_col = e[:, :, H + hd:H + hd + 1]             # [B, M, 1]
        e_src_row = e_src_t[:, hd:hd + 1, :]               # [B, 1, M]
        # logits[b,i,j] = e_dst[b,i] + e_src[b,j]  (VPU broadcast add)
        logits = e_dst_col + e_src_row                     # [B, M, M]
        # LeakyReLU(0.2) (PyG default negative slope)
        logits = jnp.where(logits > 0, logits, 0.2 * logits)
        mmax = jnp.max(logits, axis=-1, keepdims=True)
        pexp = jnp.exp(logits - mmax)
        alpha = pexp * pl.reciprocal(jnp.sum(pexp, axis=-1, keepdims=True),
                                     approx=True)
        hh = h[:, :, hd * F:(hd + 1) * F]                  # [B, M, F]
        out_h = jnp.einsum('bij,bjf->bif',
                           alpha.astype(jnp.bfloat16), hh.astype(jnp.bfloat16),
                           preferred_element_type=jnp.float32)      # [B, M, F]
        head_outs.append(out_h)
    # TODO(synk): at larger H/N, batch heads into one stacked bmm and write
    #   per-head slices into a VMEM scratch instead of a Python-list concat.

    # ---- concat heads (registers) + bias + ReLU ----------------------------
    out = jnp.concatenate(head_outs, axis=-1) + bias_ref[...]       # [B, M, C]
    out = jnp.maximum(out, 0.0)

    # ---- BatchNorm (training-mode batch stats over all B*M nodes) ----------
    out_flat = out.reshape(B * M, C)
    mean = jnp.mean(out_flat, axis=0, keepdims=True)                # [1, C]
    diff = out_flat - mean
    var = jnp.mean(diff * diff, axis=0, keepdims=True)              # biased var
    bn = gamma_ref[...] * diff * jax.lax.rsqrt(var + 1e-5) + beta_ref[...]
    out = bn.reshape(B, M, C)

    # ---- TopKPooling score: tanh((x . p) / ||p||), per node ----------------
    p = p_ref[...]                                                  # [1, C]
    inv_norm = jax.lax.rsqrt(jnp.sum(p * p))
    s = jnp.tanh(jnp.sum(out * (p * inv_norm), axis=-1))            # [B, M]

    if is_last:
        if last_pool_k is not None:
            # In-kernel TopK selection + gating + global mean/max pool.
            k = last_pool_k
            node_iota = jax.lax.broadcasted_iota(
                jnp.int32, (B, M), 1).astype(jnp.float32)           # [B, M]
            s_work = s
            sum_acc = jnp.zeros((B, C), jnp.float32)
            max_acc = jnp.full((B, C), -jnp.inf, jnp.float32)
            for _ in range(k):
                mx = jnp.max(s_work, axis=1, keepdims=True)         # [B, 1]
                sel = jnp.min(jnp.where(s_work == mx, node_iota, float(M)),
                              axis=1, keepdims=True)                # first argmax
                oh = (node_iota == sel).astype(jnp.float32)         # [B, M]
                feat = jnp.sum(oh[:, :, None] * out, axis=1) * mx   # gated [B,C]
                sum_acc = sum_acc + feat
                max_acc = jnp.maximum(max_acc, feat)
                s_work = jnp.where(oh > 0, -jnp.inf, s_work)
            o_ref[...] = jnp.concatenate([sum_acc * (1.0 / k), max_acc], axis=-1)
        else:
            # No pooling on the last block: plain global mean/max pool.
            o_ref[...] = jnp.concatenate(
                [jnp.mean(out, axis=1), jnp.max(out, axis=1)], axis=-1)
    else:
        # One packed store: features + tanh TopK score in the last channel.
        o_ref[...] = jnp.concatenate([out, s[:, :, None]], axis=-1)  # [B,M,C+1]


def gat_block(x, params, *, first_layer, is_last, pool_idx=None, pool_gate=None):
    B = x.shape[0]
    heads, fout, c_in = params["heads"], params["fout"], params["c_in"]
    C = heads * fout
    has_gather = pool_idx is not None
    M = pool_idx.shape[1] if has_gather else x.shape[1]
    last_pool_k = params["k"] if (is_last and params["ratio_pool"]) else None

    kernel = functools.partial(
        _gat_block_kernel, heads=heads, fout=fout, c_in=c_in,
        first_layer=first_layer, has_gather=has_gather, is_last=is_last,
        last_pool_k=last_pool_k)

    inputs = [x]
    in_specs = [pl.BlockSpec(x.shape, lambda i: (0, 0, 0))]
    if has_gather:
        inputs += [pool_idx, pool_gate]
        in_specs += [pl.BlockSpec(pool_idx.shape, lambda i: (0, 0)),
                     pl.BlockSpec(pool_gate.shape, lambda i: (0, 0))]
    inputs += [params["W_aug"], params["bias"], params["gamma"],
               params["beta"], params["p"]]
    in_specs += [pl.BlockSpec(params["W_aug"].shape, lambda i: (0, 0)),
                 pl.BlockSpec((1, C), lambda i: (0, 0)),
                 pl.BlockSpec((1, C), lambda i: (0, 0)),
                 pl.BlockSpec((1, C), lambda i: (0, 0)),
                 pl.BlockSpec((1, C), lambda i: (0, 0))]

    if is_last:
        out_shape = jax.ShapeDtypeStruct((B, 2 * C), jnp.float32)
        out_spec = pl.BlockSpec((B, 2 * C), lambda i: (0, 0))
    else:
        out_shape = jax.ShapeDtypeStruct((B, M, C + 1), jnp.float32)
        out_spec = pl.BlockSpec((B, M, C + 1), lambda i: (0, 0, 0))

    return pl.pallas_call(
        kernel,
        out_shape=out_shape,
        grid=(1,),
        in_specs=in_specs,
        out_specs=out_spec,
        compiler_params=pltpu.CompilerParams(
            dimension_semantics=("arbitrary",)),
    )(*inputs)


# ----------------------------------------------------------------------------
# Parameters / model wrapper
# ----------------------------------------------------------------------------
def _build_attn_matrix(a_src, a_dst, heads, fout):
    """Block-diagonal [C, 2H] so that h @ A = [e_src | e_dst] for all heads."""
    C = heads * fout
    A = jnp.zeros((C, 2 * heads), jnp.float32)
    for hd in range(heads):
        A = A.at[hd * fout:(hd + 1) * fout, hd].set(a_src[hd])
        A = A.at[hd * fout:(hd + 1) * fout, heads + hd].set(a_dst[hd])
    return A


def init_gat_params(key, input_dim, hidden_dims, num_heads, num_nodes):
    blocks = []
    last_hidden = 1
    last_nodes = input_dim
    for i, (hdim, nheads) in enumerate(zip(hidden_dims, num_heads)):
        C = hdim * nheads
        key, kw, ka1, ka2, kp = jax.random.split(key, 5)
        W = 0.2 * jax.random.normal(kw, (last_hidden, C), jnp.float32)
        a_src = 0.2 * jax.random.normal(ka1, (nheads, hdim), jnp.float32)
        a_dst = 0.2 * jax.random.normal(ka2, (nheads, hdim), jnp.float32)
        A = _build_attn_matrix(a_src, a_dst, nheads, hdim)
        # Fold the attention-coefficient matmul into the projection:
        # x @ W_aug = [h | h @ A] = [h | e]  (one MXU op per layer).
        W_aug = jnp.concatenate([W, W @ A], axis=1)        # [Fin, C + 2H]
        blocks.append({
            "W_aug": W_aug,
            "bias": jnp.zeros((1, C), jnp.float32),
            "gamma": jnp.ones((1, C), jnp.float32),
            "beta": jnp.zeros((1, C), jnp.float32),
            "p": 0.2 * jax.random.normal(kp, (1, C), jnp.float32),
            "heads": nheads,
            "fout": hdim,
            "c_in": last_hidden,
            "ratio_pool": num_nodes[i] < last_nodes,       # ratio < 0.99 -> pool
            "k": num_nodes[i],
        })
        last_hidden = C
        last_nodes = num_nodes[i]
    return blocks


def gat_forward(data, blocks):
    B, D = data.shape
    x = data.reshape(B, D, 1).astype(jnp.float32)    # N = D nodes, 1 feat/node
    pool_idx = pool_gate = None
    n_blocks = len(blocks)
    for i, blk in enumerate(blocks):
        is_last = (i == n_blocks - 1)
        out = gat_block(x, blk, first_layer=(i == 0), is_last=is_last,
                        pool_idx=pool_idx, pool_gate=pool_gate)
        if is_last:
            return out                               # [B, 2 * hidden * heads]
        # dropout = 0.0 -> Identity
        C = blk["heads"] * blk["fout"]
        if blk["ratio_pool"]:
            scores = out[:, :, C]                    # packed tanh TopK scores
            vals, idx = jax.lax.top_k(scores, blk["k"])
            pool_idx, pool_gate = idx.astype(jnp.int32), vals
        else:
            pool_idx = pool_gate = None
        x = out
    return out


if __name__ == "__main__":
    key = jax.random.PRNGKey(0)
    k_data, k_params = jax.random.split(key)

    # Small config consistent with the module:
    batch_size = 2
    input_dim = 16                 # -> 16 nodes per graph, scalar node feature
    hidden_dims = [8, 8]
    num_heads = [2, 2]
    num_nodes = [8, 4]             # pooling ratios 0.5, 0.5

    blocks = init_gat_params(k_params, input_dim, hidden_dims, num_heads,
                             num_nodes)
    data = jax.random.normal(k_data, (batch_size, input_dim), jnp.float32)

    out = gat_forward(data, blocks)
    out = jax.block_until_ready(out)

    expected_dim = 2 * hidden_dims[-1] * num_heads[-1]   # mean || max
    assert out.shape == (batch_size, expected_dim), out.shape
    assert jnp.all(jnp.isfinite(out))
    print("KERNEL_OK")
</pallas_src>

<mosaic_0001>
module attributes {stable_mosaic.version = 11 : i64} {
  func.func @_gat_block_kernel(%arg0: i32, %arg1: memref<2x16x1xf32, #tpu.memory_space<vmem>>, %arg2: memref<1x20xf32, #tpu.memory_space<vmem>>, %arg3: memref<1x16xf32, #tpu.memory_space<vmem>>, %arg4: memref<1x16xf32, #tpu.memory_space<vmem>>, %arg5: memref<1x16xf32, #tpu.memory_space<vmem>>, %arg6: memref<1x16xf32, #tpu.memory_space<vmem>>, %arg7: memref<2x16x17xf32, #tpu.memory_space<vmem>>) attributes {dimension_semantics = [#tpu.dimension_semantics<arbitrary>], iteration_bounds = array<i64: 1>, scalar_prefetch = 0 : i64, scratch_operands = 0 : i64, tpu.core_type = #tpu.core_type<tc>, window_params = [{pipeline_mode = #tpu.pipeline_mode<synchronous>, transform_indices = @transform_0, window_bounds = array<i64: 2, 16, 1>}, {pipeline_mode = #tpu.pipeline_mode<synchronous>, transform_indices = @transform_1, window_bounds = array<i64: 1, 20>}, {pipeline_mode = #tpu.pipeline_mode<synchronous>, transform_indices = @transform_2, window_bounds = array<i64: 1, 16>}, {pipeline_mode = #tpu.pipeline_mode<synchronous>, transform_indices = @transform_3, window_bounds = array<i64: 1, 16>}, {pipeline_mode = #tpu.pipeline_mode<synchronous>, transform_indices = @transform_4, window_bounds = array<i64: 1, 16>}, {pipeline_mode = #tpu.pipeline_mode<synchronous>, transform_indices = @transform_5, window_bounds = array<i64: 1, 16>}, {pipeline_mode = #tpu.pipeline_mode<synchronous>, transform_indices = @transform_6, window_bounds = array<i64: 2, 16, 17>}]} {
    %c0 = arith.constant 0 : index
    %c0_0 = arith.constant 0 : index
    %c0_1 = arith.constant 0 : index
    %0 = vector.load %arg1[%c0, %c0_0, %c0_1] : memref<2x16x1xf32, #tpu.memory_space<vmem>>, vector<2x16x1xf32>
    %c0_2 = arith.constant 0 : index
    %c0_3 = arith.constant 0 : index
    %1 = vector.load %arg2[%c0_2, %c0_3] : memref<1x20xf32, #tpu.memory_space<vmem>>, vector<1x20xf32>
    %2 = vector.shape_cast %1 : vector<1x20xf32> to vector<1x1x20xf32>
    %3 = vector.broadcast %0 : vector<2x16x1xf32> to vector<2x16x20xf32>
    %4 = vector.broadcast %2 : vector<1x1x20xf32> to vector<2x16x20xf32>
    %5 = arith.mulf %3, %4 : vector<2x16x20xf32>
    %6 = vector.extract_strided_slice %5 {offsets = [0, 0, 0], sizes = [2, 16, 16], strides = [1, 1, 1]} : vector<2x16x20xf32> to vector<2x16x16xf32>
    %7 = vector.extract_strided_slice %5 {offsets = [0, 0, 16], sizes = [2, 16, 4], strides = [1, 1, 1]} : vector<2x16x20xf32> to vector<2x16x4xf32>
    %8 = vector.extract_strided_slice %7 {offsets = [0, 0, 0], sizes = [2, 16, 2], strides = [1, 1, 1]} : vector<2x16x4xf32> to vector<2x16x2xf32>
    %9 = tpu.transpose %8, [0, 2, 1] : vector<2x16x2xf32> -> vector<2x2x16xf32>
    %10 = vector.extract_strided_slice %7 {offsets = [0, 0, 2], sizes = [2, 16, 1], strides = [1, 1, 1]} : vector<2x16x4xf32> to vector<2x16x1xf32>
    %11 = vector.extract_strided_slice %9 {offsets = [0, 0, 0], sizes = [2, 1, 16], strides = [1, 1, 1]} : vector<2x2x16xf32> to vector<2x1x16xf32>
    %12 = vector.broadcast %10 : vector<2x16x1xf32> to vector<2x16x16xf32>
    %13 = vector.broadcast %11 : vector<2x1x16xf32> to vector<2x16x16xf32>
    %14 = arith.addf %12, %13 : vector<2x16x16xf32>
    %cst = arith.constant 0.000000e+00 : f32
    %15 = vector.broadcast %cst : f32 to vector<2x16x16xf32>
    %16 = arith.cmpf ogt, %14, %15 : vector<2x16x16xf32>
    %cst_4 = arith.constant 2.000000e-01 : f32
    %17 = vector.broadcast %cst_4 : f32 to vector<2x16x16xf32>
    %18 = arith.mulf %17, %14 : vector<2x16x16xf32>
    %19 = arith.select %16, %14, %18 : vector<2x16x16xi1>, vector<2x16x16xf32>
    %cst_5 = arith.constant dense<0xFF800000> : vector<2x16xf32>
    %20 = vector.multi_reduction <maximumf>, %19, %cst_5 [2] : vector<2x16x16xf32> to vector<2x16xf32>
    %21 = vector.shape_cast %20 : vector<2x16xf32> to vector<2x16x1xf32>
    %22 = vector.broadcast %21 : vector<2x16x1xf32> to vector<2x16x16xf32>
    %23 = arith.subf %19, %22 : vector<2x16x16xf32>
    %24 = math.exp %23 : vector<2x16x16xf32>
    %cst_6 = arith.constant dense<0.000000e+00> : vector<2x16xf32>
    %25 = vector.multi_reduction <add>, %24, %cst_6 [2] : vector<2x16x16xf32> to vector<2x16xf32>
    %26 = vector.shape_cast %25 : vector<2x16xf32> to vector<2x16x1xf32>
    %27 = tpu.reciprocal %26 {approx = true} : vector<2x16x1xf32> -> vector<2x16x1xf32>
    %28 = vector.broadcast %27 : vector<2x16x1xf32> to vector<2x16x16xf32>
    %29 = arith.mulf %24, %28 : vector<2x16x16xf32>
    %30 = vector.extract_strided_slice %6 {offsets = [0, 0, 0], sizes = [2, 16, 8], strides = [1, 1, 1]} : vector<2x16x16xf32> to vector<2x16x8xf32>
    %31 = arith.truncf %29 : vector<2x16x16xf32> to vector<2x16x16xbf16>
    %32 = arith.truncf %30 : vector<2x16x8xf32> to vector<2x16x8xbf16>
    "tpu.trace_start"() <{level = 10 : i32, message = "bij,bjf->bif"}> : () -> ()
    %cst_7 = arith.constant dense<0.000000e+00> : vector<2x16x8xf32>
    %33 = tpu.matmul %31, %32, %cst_7 {dimension_numbers = #tpu.dot_dimension_numbers<[2], [1], [1], [2], [0, 0, 0, 1, 1, 2], [0], [0]>} : vector<2x16x16xbf16>, vector<2x16x8xbf16>, vector<2x16x8xf32> -> vector<2x16x8xf32>
    "tpu.trace_stop"() : () -> ()
    %34 = vector.extract_strided_slice %7 {offsets = [0, 0, 3], sizes = [2, 16, 1], strides = [1, 1, 1]} : vector<2x16x4xf32> to vector<2x16x1xf32>
    %35 = vector.extract_strided_slice %9 {offsets = [0, 1, 0], sizes = [2, 1, 16], strides = [1, 1, 1]} : vector<2x2x16xf32> to vector<2x1x16xf32>
    %36 = vector.broadcast %34 : vector<2x16x1xf32> to vector<2x16x16xf32>
    %37 = vector.broadcast %35 : vector<2x1x16xf32> to vector<2x16x16xf32>
    %38 = arith.addf %36, %37 : vector<2x16x16xf32>
    %cst_8 = arith.constant 0.000000e+00 : f32
    %39 = vector.broadcast %cst_8 : f32 to vector<2x16x16xf32>
    %40 = arith.cmpf ogt, %38, %39 : vector<2x16x16xf32>
    %cst_9 = arith.constant 2.000000e-01 : f32
    %41 = vector.broadcast %cst_9 : f32 to vector<2x16x16xf32>
    %42 = arith.mulf %41, %38 : vector<2x16x16xf32>
    %43 = arith.select %40, %38, %42 : vector<2x16x16xi1>, vector<2x16x16xf32>
    %cst_10 = arith.constant dense<0xFF800000> : vector<2x16xf32>
    %44 = vector.multi_reduction <maximumf>, %43, %cst_10 [2] : vector<2x16x16xf32> to vector<2x16xf32>
    %45 = vector.shape_cast %44 : vector<2x16xf32> to vector<2x16x1xf32>
    %46 = vector.broadcast %45 : vector<2x16x1xf32> to vector<2x16x16xf32>
    %47 = arith.subf %43, %46 : vector<2x16x16xf32>
    %48 = math.exp %47 : vector<2x16x16xf32>
    %cst_11 = arith.constant dense<0.000000e+00> : vector<2x16xf32>
    %49 = vector.multi_reduction <add>, %48, %cst_11 [2] : vector<2x16x16xf32> to vector<2x16xf32>
    %50 = vector.shape_cast %49 : vector<2x16xf32> to vector<2x16x1xf32>
    %51 = tpu.reciprocal %50 {approx = true} : vector<2x16x1xf32> -> vector<2x16x1xf32>
    %52 = vector.broadcast %51 : vector<2x16x1xf32> to vector<2x16x16xf32>
    %53 = arith.mulf %48, %52 : vector<2x16x16xf32>
    %54 = vector.extract_strided_slice %6 {offsets = [0, 0, 8], sizes = [2, 16, 8], strides = [1, 1, 1]} : vector<2x16x16xf32> to vector<2x16x8xf32>
    %55 = arith.truncf %53 : vector<2x16x16xf32> to vector<2x16x16xbf16>
    %56 = arith.truncf %54 : vector<2x16x8xf32> to vector<2x16x8xbf16>
    "tpu.trace_start"() <{level = 10 : i32, message = "bij,bjf->bif"}> : () -> ()
    %cst_12 = arith.constant dense<0.000000e+00> : vector<2x16x8xf32>
    %57 = tpu.matmul %55, %56, %cst_12 {dimension_numbers = #tpu.dot_dimension_numbers<[2], [1], [1], [2], [0, 0, 0, 1, 1, 2], [0], [0]>} : vector<2x16x16xbf16>, vector<2x16x8xbf16>, vector<2x16x8xf32> -> vector<2x16x8xf32>
    "tpu.trace_stop"() : () -> ()
    %58 = tpu.concatenate %33, %57 in 2 : vector<2x16x8xf32>, vector<2x16x8xf32> -> vector<2x16x16xf32>
    %c0_13 = arith.constant 0 : index
    %c0_14 = arith.constant 0 : index
    %59 = vector.load %arg3[%c0_13, %c0_14] : memref<1x16xf32, #tpu.memory_space<vmem>>, vector<1x16xf32>
    %60 = vector.shape_cast %59 : vector<1x16xf32> to vector<1x1x16xf32>
    %61 = vector.broadcast %60 : vector<1x1x16xf32> to vector<2x16x16xf32>
    %62 = arith.addf %58, %61 : vector<2x16x16xf32>
    %cst_15 = arith.constant 0.000000e+00 : f32
    %63 = vector.broadcast %cst_15 : f32 to vector<2x16x16xf32>
    %64 = arith.maximumf %62, %63 : vector<2x16x16xf32>
    %65 = vector.shape_cast %64 : vector<2x16x16xf32> to vector<32x16xf32>
    %cst_16 = arith.constant dense<0.000000e+00> : vector<16xf32>
    %66 = vector.multi_reduction <add>, %65, %cst_16 [0] : vector<32x16xf32> to vector<16xf32>
    %67 = vector.shape_cast %66 : vector<16xf32> to vector<1x16xf32>
    %cst_17 = arith.constant 3.200000e+01 : f32
    %68 = vector.broadcast %cst_17 : f32 to vector<1x16xf32>
    %69 = arith.divf %67, %68 : vector<1x16xf32>
    %70 = vector.broadcast %69 : vector<1x16xf32> to vector<32x16xf32>
    %71 = arith.subf %65, %70 : vector<32x16xf32>
    %72 = arith.mulf %71, %71 : vector<32x16xf32>
    %cst_18 = arith.constant dense<0.000000e+00> : vector<16xf32>
    %73 = vector.multi_reduction <add>, %72, %cst_18 [0] : vector<32x16xf32> to vector<16xf32>
    %74 = vector.shape_cast %73 : vector<16xf32> to vector<1x16xf32>
    %cst_19 = arith.constant 3.200000e+01 : f32
    %75 = vector.broadcast %cst_19 : f32 to vector<1x16xf32>
    %76 = arith.divf %74, %75 : vector<1x16xf32>
    %c0_20 = arith.constant 0 : index
    %c0_21 = arith.constant 0 : index
    %77 = vector.load %arg4[%c0_20, %c0_21] : memref<1x16xf32, #tpu.memory_space<vmem>>, vector<1x16xf32>
    %78 = vector.broadcast %77 : vector<1x16xf32> to vector<32x16xf32>
    %79 = arith.mulf %78, %71 : vector<32x16xf32>
    %cst_22 = arith.constant 9.99999974E-6 : f32
    %80 = vector.broadcast %cst_22 : f32 to vector<1x16xf32>
    %81 = arith.addf %76, %80 : vector<1x16xf32>
    %82 = math.rsqrt %81 : vector<1x16xf32>
    %83 = vector.broadcast %82 : vector<1x16xf32> to vector<32x16xf32>
    %84 = arith.mulf %79, %83 : vector<32x16xf32>
    %c0_23 = arith.constant 0 : index
    %c0_24 = arith.constant 0 : index
    %85 = vector.load %arg5[%c0_23, %c0_24] : memref<1x16xf32, #tpu.memory_space<vmem>>, vector<1x16xf32>
    %86 = vector.broadcast %85 : vector<1x16xf32> to vector<32x16xf32>
    %87 = arith.addf %84, %86 : vector<32x16xf32>
    %88 = vector.shape_cast %87 : vector<32x16xf32> to vector<2x16x16xf32>
    %c0_25 = arith.constant 0 : index
    %c0_26 = arith.constant 0 : index
    %89 = vector.load %arg6[%c0_25, %c0_26] : memref<1x16xf32, #tpu.memory_space<vmem>>, vector<1x16xf32>
    %90 = arith.mulf %89, %89 : vector<1x16xf32>
    %91 = vector.shape_cast %90 : vector<1x16xf32> to vector<1x1x16xf32>
    %cst_27 = arith.constant dense<0.000000e+00> : vector<1xf32>
    %92 = vector.multi_reduction <add>, %91, %cst_27 [1, 2] : vector<1x1x16xf32> to vector<1xf32>
    %93 = vector.shape_cast %92 : vector<1xf32> to vector<1x1x1xf32>
    %94 = vector.extract %93[0, 0, 0] : f32 from vector<1x1x1xf32>
    %95 = math.rsqrt %94 : f32
    %96 = vector.broadcast %95 : f32 to vector<1x16xf32>
    %97 = arith.mulf %89, %96 : vector<1x16xf32>
    %98 = vector.shape_cast %97 : vector<1x16xf32> to vector<1x1x16xf32>
    %99 = vector.broadcast %98 : vector<1x1x16xf32> to vector<2x16x16xf32>
    %100 = arith.mulf %88, %99 : vector<2x16x16xf32>
    %cst_28 = arith.constant dense<0.000000e+00> : vector<2x16xf32>
    %101 = vector.multi_reduction <add>, %100, %cst_28 [2] : vector<2x16x16xf32> to vector<2x16xf32>
    %102 = math.tanh %101 : vector<2x16xf32>
    %103 = vector.shape_cast %102 : vector<2x16xf32> to vector<2x16x1xf32>
    %104 = tpu.concatenate %88, %103 in 2 : vector<2x16x16xf32>, vector<2x16x1xf32> -> vector<2x16x17xf32>
    %c0_29 = arith.constant 0 : index
    %c0_30 = arith.constant 0 : index
    %c0_31 = arith.constant 0 : index
    %105 = vector.load %arg7[%c0_29, %c0_30, %c0_31] : memref<2x16x17xf32, #tpu.memory_space<vmem>>, vector<2x16x17xf32>
    tpu.vector_store %arg7[%c0_29, %c0_30, %c0_31], %104 {strides = array<i32>} : memref<2x16x17xf32, #tpu.memory_space<vmem>>, vector<2x16x17xf32>,
    return
  }
  func.func @transform_0(%arg0: i32) -> (i32, i32, i32) {
    %c0_i32 = arith.constant 0 : i32
    %c0_i32_0 = arith.constant 0 : i32
    %c0_i32_1 = arith.constant 0 : i32
    %c0_i32_2 = arith.constant 0 : i32
    return %c0_i32, %c0_i32_0, %c0_i32_1 : i32, i32, i32
  }
  func.func @transform_1(%arg0: i32) -> (i32, i32) {
    %c0_i32 = arith.constant 0 : i32
    %c0_i32_0 = arith.constant 0 : i32
    %c0_i32_1 = arith.constant 0 : i32
    return %c0_i32, %c0_i32_0 : i32, i32
  }
  func.func @transform_2(%arg0: i32) -> (i32, i32) {
    %c0_i32 = arith.constant 0 : i32
    %c0_i32_0 = arith.constant 0 : i32
    %c0_i32_1 = arith.constant 0 : i32
    return %c0_i32, %c0_i32_0 : i32, i32
  }
  func.func @transform_3(%arg0: i32) -> (i32, i32) {
    %c0_i32 = arith.constant 0 : i32
    %c0_i32_0 = arith.constant 0 : i32
    %c0_i32_1 = arith.constant 0 : i32
    return %c0_i32, %c0_i32_0 : i32, i32
  }
  func.func @transform_4(%arg0: i32) -> (i32, i32) {
    %c0_i32 = arith.constant 0 : i32
    %c0_i32_0 = arith.constant 0 : i32
    %c0_i32_1 = arith.constant 0 : i32
    return %c0_i32, %c0_i32_0 : i32, i32
  }
  func.func @transform_5(%arg0: i32) -> (i32, i32) {
    %c0_i32 = arith.constant 0 : i32
    %c0_i32_0 = arith.constant 0 : i32
    %c0_i32_1 = arith.constant 0 : i32
    return %c0_i32, %c0_i32_0 : i32, i32
  }
  func.func @transform_6(%arg0: i32) -> (i32, i32, i32) {
    %c0_i32 = arith.constant 0 : i32
    %c0_i32_0 = arith.constant 0 : i32
    %c0_i32_1 = arith.constant 0 : i32
    %c0_i32_2 = arith.constant 0 : i32
    return %c0_i32, %c0_i32_0, %c0_i32_1 : i32, i32, i32
  }
}

</mosaic_0001>

<llo_original>
// kernel: tpu_custom_call.1
$region0: #{tpu_custom_call.1}
  #allocation0 [shape = 'u32[]', space=smem, size = 0x4, offset = 0x4, fixed_abs, tag = 'smem constant byte address 0x4 - core index']
  #allocation1 [shape = 'u32[144,128]{1,0:T(1,128)}', space=vmem, size = 0x12000, scoped, tag = 'internal scratch']
  %s0 = inlined_call_operand.vmem [shape: f32[2,16,1], index: 0, kind: input, shape index: {}]
  %s1 = inlined_call_operand.vmem [shape: f32[1,20], index: 1, kind: input, shape index: {}]
  %s2 = inlined_call_operand.vmem [shape: f32[1,16], index: 2, kind: input, shape index: {}]
  %s3 = inlined_call_operand.vmem [shape: f32[1,16], index: 3, kind: input, shape index: {}]
  %s4 = inlined_call_operand.vmem [shape: f32[1,16], index: 4, kind: input, shape index: {}]
  %s5 = inlined_call_operand.vmem [shape: f32[1,16], index: 5, kind: input, shape index: {}]
  %s6 = inlined_call_operand.hbm [shape: f32[2,16,17], index: 6, kind: output, shape index: {}]
  %s7 = sld [smem:[#allocation0]]
  $region34: #{tpu_custom_call.1} parent=0
    _
  %s9 = ssub.s32 1, %s7
  %s10 = scalar_select 0, %s9, %s7
  $region1: #{tpu_custom_call.1} parent=0
    #allocation2 [shape = 'u8[16384]{0}', space=vmem, size = 0x4000, scoped, tag = 'output window, operand 0, single buffered']
    #allocation3 [shape = 's32[1]{0}', space=sflag, size = 0x4, scoped, tag = 'scoped memory for tpu_custom_call.1']
    %11 = vsyncpa [#allocation3], 0
    // Predicated region
    $region2: #{tpu_custom_call.1} parent=1 // pred_check
      _
    $region3: #{tpu_custom_call.1} parent=1 // pred_check_branch
      %13 = sbr.rel (0) target = $region5
    $region4: #{tpu_custom_call.1} parent=1 // pred_region
      _
    $region5: #{tpu_custom_call.1} parent=1 // pred_fallthru
      _
    // Predicated region
    $region6: #{tpu_custom_call.1} parent=1 // pred_check
      _
    $region7: #{tpu_custom_call.1} parent=1 // pred_check_branch
      %15 = sbr.rel (0) target = $region9
    $region8: #{tpu_custom_call.1} parent=1 // pred_region
      _
    $region9: #{tpu_custom_call.1} parent=1 // pred_fallthru
      _
    // Predicated region
    $region10: #{tpu_custom_call.1} parent=1 // pred_check
      _
    $region11: #{tpu_custom_call.1} parent=1 // pred_check_branch
      %17 = sbr.rel (0) target = $region13
    $region12: #{tpu_custom_call.1} parent=1 // pred_region
      _
    $region13: #{tpu_custom_call.1} parent=1 // pred_fallthru
      _
    // Predicated region
    $region14: #{tpu_custom_call.1} parent=1 // pred_check
      _
    $region15: #{tpu_custom_call.1} parent=1 // pred_check_branch
      %19 = sbr.rel (0) target = $region17
    $region16: #{tpu_custom_call.1} parent=1 // pred_region
      _
    $region17: #{tpu_custom_call.1} parent=1 // pred_fallthru
      _
    // Predicated region
    $region18: #{tpu_custom_call.1} parent=1 // pred_check
      _
    $region19: #{tpu_custom_call.1} parent=1 // pred_check_branch
      %21 = sbr.rel (0) target = $region21
    $region20: #{tpu_custom_call.1} parent=1 // pred_region
      _
    $region21: #{tpu_custom_call.1} parent=1 // pred_fallthru
      _
    // Predicated region
    $region22: #{tpu_custom_call.1} parent=1 // pred_check
      _
    $region23: #{tpu_custom_call.1} parent=1 // pred_check_branch
      %23 = sbr.rel (0) target = $region25
    $region24: #{tpu_custom_call.1} parent=1 // pred_region
      _
    $region25: #{tpu_custom_call.1} parent=1 // pred_fallthru
      _
    %v25 = vld [vmem:[%s0] sm:$0xff]
    %v26 = vld [vmem:[%s0 + $0x8] sm:$0xff]
    %v27 = vld [vmem:[%s0 + $0x10] sm:$0xff]
    %v28 = vld [vmem:[%s0 + $0x18] sm:$0xff]
    %v29 = vld [vmem:[%s1] sm:$0x1]
    %31 = vset.pattern.permute.xlu0 0
    %32 = vperm.xlu0 %31, %v25
    %v33 = vpop.permute.xlu0 %32
    %36 = vset.pattern.permute.xlu0 0
    %37 = vperm.xlu0 %36, %v26
    %v38 = vpop.permute.xlu0 %37
    %41 = vset.pattern.permute.xlu0 0
    %42 = vperm.xlu0 %41, %v27
    %v43 = vpop.permute.xlu0 %42
    %46 = vset.pattern.permute.xlu0 0
    %47 = vperm.xlu0 %46, %v28
    %v48 = vpop.permute.xlu0 %47
    %v51 = vlaneseq
    %v52 = vshrl.u32 %v51, 7
    %v53 = vsub.s32 0, %v52
    %v54 = vrot.slane %v29, %v53
    %v56 = vmul.f32 %v33, %v54
    %v57 = vmul.f32 %v38, %v54
    %v58 = vmul.f32 %v43, %v54
    %v59 = vmul.f32 %v48, %v54
    %64 = vrot.lane.b32.xlu0 %v56, 112
    %v65 = vpop.permute.xlu0 %64
    %66 = vrot.lane.b32.xlu0 %v57, 112
    %v67 = vpop.permute.xlu0 %66
    %68 = vrot.lane.b32.xlu0 %v58, 112
    %v69 = vpop.permute.xlu0 %68
    %70 = vrot.lane.b32.xlu0 %v59, 112
    %v71 = vpop.permute.xlu0 %70
    %76 = vxpose.xlu0.b32.start [1/16] %v65, 128
    %77 = vxpose.xlu0.b32.cont [2/16] %v67, 128
    %78 = vxpose.xlu0.b32.cont [3/16] 0.0, 128
    %79 = vxpose.xlu0.b32.cont [4/16] 0.0, 128
    %80 = vxpose.xlu0.b32.cont [5/16] 0.0, 128
    %81 = vxpose.xlu0.b32.cont [6/16] 0.0, 128
    %82 = vxpose.xlu0.b32.cont [7/16] 0.0, 128
    %83 = vxpose.xlu0.b32.cont [8/16] 0.0, 128
    %84 = vxpose.xlu0.b32.cont [9/16] 0.0, 128
    %85 = vxpose.xlu0.b32.cont [10/16] 0.0, 128
    %86 = vxpose.xlu0.b32.cont [11/16] 0.0, 128
    %87 = vxpose.xlu0.b32.cont [12/16] 0.0, 128
    %88 = vxpose.xlu0.b32.cont [13/16] 0.0, 128
    %89 = vxpose.xlu0.b32.cont [14/16] 0.0, 128
    %90 = vxpose.xlu0.b32.cont [15/16] 0.0, 128
    %91 = vxpose.xlu0.b32.end [16/16] 0.0, 128
    %v92 = vpop.trf.xlu0
    %v93 = vpop.trf.xlu0
    %v94 = vpop.trf.xlu0
    %v95 = vpop.trf.xlu0
    %v96 = vpop.trf.xlu0
    %v97 = vpop.trf.xlu0
    %v98 = vpop.trf.xlu0
    %v99 = vpop.trf.xlu0
    %v100 = vpop.trf.xlu0
    %v101 = vpop.trf.xlu0
    %v102 = vpop.trf.xlu0
    %v103 = vpop.trf.xlu0
    %v104 = vpop.trf.xlu0
    %v105 = vpop.trf.xlu0
    %v106 = vpop.trf.xlu0
    %v107 = vpop.trf.xlu0
    %108 = vxpose.xlu0.b32.start [1/16] %v69, 128
    %109 = vxpose.xlu0.b32.cont [2/16] %v71, 128
    %110 = vxpose.xlu0.b32.cont [3/16] 0.0, 128
    %111 = vxpose.xlu0.b32.cont [4/16] 0.0, 128
    %112 = vxpose.xlu0.b32.cont [5/16] 0.0, 128
    %113 = vxpose.xlu0.b32.cont [6/16] 0.0, 128
    %114 = vxpose.xlu0.b32.cont [7/16] 0.0, 128
    %115 = vxpose.xlu0.b32.cont [8/16] 0.0, 128
    %116 = vxpose.xlu0.b32.cont [9/16] 0.0, 128
    %117 = vxpose.xlu0.b32.cont [10/16] 0.0, 128
    %118 = vxpose.xlu0.b32.cont [11/16] 0.0, 128
    %119 = vxpose.xlu0.b32.cont [12/16] 0.0, 128
    %120 = vxpose.xlu0.b32.cont [13/16] 0.0, 128
    %121 = vxpose.xlu0.b32.cont [14/16] 0.0, 128
    %122 = vxpose.xlu0.b32.cont [15/16] 0.0, 128
    %123 = vxpose.xlu0.b32.end [16/16] 0.0, 128
    %v124 = vpop.trf.xlu0
    %v125 = vpop.trf.xlu0
    %v126 = vpop.trf.xlu0
    %v127 = vpop.trf.xlu0
    %v128 = vpop.trf.xlu0
    %v129 = vpop.trf.xlu0
    %v130 = vpop.trf.xlu0
    %v131 = vpop.trf.xlu0
    %v132 = vpop.trf.xlu0
    %v133 = vpop.trf.xlu0
    %v134 = vpop.trf.xlu0
    %v135 = vpop.trf.xlu0
    %v136 = vpop.trf.xlu0
    %v137 = vpop.trf.xlu0
    %v138 = vpop.trf.xlu0
    %v139 = vpop.trf.xlu0
    %140 = vset.pattern.permute.xlu0 18
    %141 = vperm.xlu0 %140, %v56
    %v142 = vpop.permute.xlu0 %141
    %144 = vset.pattern.permute.xlu0 18
    %145 = vperm.xlu0 %144, %v57
    %v146 = vpop.permute.xlu0 %145
    %148 = vset.pattern.permute.xlu0 18
    %149 = vperm.xlu0 %148, %v58
    %v150 = vpop.permute.xlu0 %149
    %152 = vset.pattern.permute.xlu0 18
    %153 = vperm.xlu0 %152, %v59
    %v154 = vpop.permute.xlu0 %153
    %v156 = vlaneseq
    %v157 = vshrl.u32 %v156, 7
    %v158 = vsub.s32 0, %v157
    %v159 = vrot.slane %v92, %v158
    %v160 = vlaneseq
    %v161 = vshrl.u32 %v160, 7
    %v162 = vsub.s32 0, %v161
    %v163 = vrot.slane %v124, %v162
    %v164 = vadd.f32 %v142, %v159
    %v165 = vadd.f32 %v146, %v159
    %v166 = vadd.f32 %v150, %v163
    %v167 = vadd.f32 %v154, %v163
    %vm168 = vcmp.gt.f32.partialorder %v164, 0.0
    %vm169 = vcmp.gt.f32.partialorder %v165, 0.0
    %vm170 = vcmp.gt.f32.partialorder %v166, 0.0
    %vm171 = vcmp.gt.f32.partialorder %v167, 0.0
    %v172 = vmul.f32 %v164, 0.2
    %v173 = vmul.f32 %v165, 0.2
    %v174 = vmul.f32 %v166, 0.2
    %v175 = vmul.f32 %v167, 0.2
    %v176 = vsel %vm168, %v164, %v172
    %v177 = vsel %vm169, %v165, %v173
    %v178 = vsel %vm170, %v166, %v174
    %v179 = vsel %vm171, %v167, %v175
    %vm180 = vcmask 130048
    %v181 = vsel %vm180, %v176, -inf
    %182 = vmax.xlane.f32.xlu0 %v181
    %v183 = vpop.xlane.xlu0 %182
    %v184 = vsel %vm180, %v177, -inf
    %185 = vmax.xlane.f32.xlu0 %v184
    %v186 = vpop.xlane.xlu0 %185
    %v187 = vsel %vm180, %v178, -inf
    %188 = vmax.xlane.f32.xlu0 %v187
    %v189 = vpop.xlane.xlu0 %188
    %v190 = vsel %vm180, %v179, -inf
    %191 = vmax.xlane.f32.xlu0 %v190
    %v192 = vpop.xlane.xlu0 %191
    %v193 = vsub.f32 %v176, %v183
    %v194 = vsub.f32 %v177, %v186
    %v195 = vsub.f32 %v178, %v189
    %v196 = vsub.f32 %v179, %v192
    %v197 = vmul.f32 %v193, 1.442695
    %v198 = vpow.pop %v197
    %v199 = vmul.f32 %v194, 1.442695
    %v200 = vpow.pop %v199
    %v201 = vmul.f32 %v195, 1.442695
    %v202 = vpow.pop %v201
    %v203 = vmul.f32 %v196, 1.442695
    %v204 = vpow.pop %v203
    %v205 = vsel %vm180, %v198, 0.0
    %206 = vadd.xlane.f32.xlu0 %v205
    %v207 = vpop.xlane.xlu0 %206
    %v208 = vsel %vm180, %v200, 0.0
    %209 = vadd.xlane.f32.xlu0 %v208
    %v210 = vpop.xlane.xlu0 %209
    %v211 = vsel %vm180, %v202, 0.0
    %212 = vadd.xlane.f32.xlu0 %v211
    %v213 = vpop.xlane.xlu0 %212
    %v214 = vsel %vm180, %v204, 0.0
    %215 = vadd.xlane.f32.xlu0 %v214
    %v216 = vpop.xlane.xlu0 %215
    %v217 = vrcp.pop %v207
    %v218 = vrcp.pop %v210
    %v219 = vrcp.pop %v213
    %v220 = vrcp.pop %v216
    %v221 = vmul.f32 %v198, %v217
    %v222 = vmul.f32 %v200, %v218
    %v223 = vmul.f32 %v202, %v219
    %v224 = vmul.f32 %v204, %v220
    %v225 = vpack.c.bf16 %v222, %v221
    %v226 = vpack.c.bf16 %v224, %v223
    %v227 = vpack.c.bf16 %v57, %v56
    %v228 = vpack.c.bf16 %v59, %v58
    %v230 = vsel %vm180, %v225, 0
    %232 = vmatprep.subr.bf16.mxu0 0
    %233 = vmatpush1.bf16.msra.mxu0 0
    %234 = vmatprep.subr.bf16.mxu0 0
    %235 = vmatpush1.bf16.msra.mxu0 0
    %236 = vmatprep.subr.bf16.mxu0 0
    %237 = vmatpush1.bf16.msra.mxu0 0
    %238 = vmatprep.subr.bf16.mxu0 0
    %239 = vmatpush1.bf16.msra.mxu0 0
    %240 = vmatprep.subr.bf16.mxu0 0
    %241 = vmatpush1.bf16.msra.mxu0 0
    %242 = vmatprep.subr.bf16.mxu0 0
    %243 = vmatpush1.bf16.msra.mxu0 0
    %244 = vmatprep.subr.bf16.mxu0 0
    %245 = vmatpush1.bf16.msra.mxu0 0
    %246 = vmatprep.subr.bf16.mxu0 0
    %247 = vmatpush1.bf16.msra.mxu0 %v227
    %248 = vmatprep.subr.bf16.mxu0 0
    %249 = vmatpush2.bf16.msra.mxu0 0
    %250 = vmatprep.subr.bf16.mxu0 0
    %251 = vmatpush2.bf16.msra.mxu0 0
    %252 = vmatprep.subr.bf16.mxu0 0
    %253 = vmatpush2.bf16.msra.mxu0 0
    %254 = vmatprep.subr.bf16.mxu0 0
    %255 = vmatpush2.bf16.msra.mxu0 0
    %256 = vmatprep.subr.bf16.mxu0 0
    %257 = vmatpush2.bf16.msra.mxu0 0
    %258 = vmatprep.subr.bf16.mxu0 0
    %259 = vmatpush2.bf16.msra.mxu0 0
    %260 = vmatprep.subr.bf16.mxu0 0
    %261 = vmatpush2.bf16.msra.mxu0 0
    %262 = vmatprep.subr.bf16.mxu0 0
    %263 = vmatpush2.bf16.msra.mxu0 0
    %264 = vmatprep.mubr.bf16.mxu0 0
    %265 = vmatmul.mubr.bf16.gmra.mxu0 %v230
    %v266 = vpop.f32.mrf.mxu0
    %v267 = vadd.f32 0.0, %v266
    %v268 = vpop.f32.mrf.mxu0
    %v269 = vpop.f32.mrf.mxu0
    %v270 = vadd.f32 0.0, %v269
    %v271 = vpop.f32.mrf.mxu0
    %272 = vdwg.mxu0
    %v274 = vsel %vm180, %v226, 0
    %276 = vmatprep.subr.bf16.mxu0 0
    %277 = vmatpush1.bf16.msra.mxu0 0
    %278 = vmatprep.subr.bf16.mxu0 0
    %279 = vmatpush1.bf16.msra.mxu0 0
    %280 = vmatprep.subr.bf16.mxu0 0
    %281 = vmatpush1.bf16.msra.mxu0 0
    %282 = vmatprep.subr.bf16.mxu0 0
    %283 = vmatpush1.bf16.msra.mxu0 0
    %284 = vmatprep.subr.bf16.mxu0 0
    %285 = vmatpush1.bf16.msra.mxu0 0
    %286 = vmatprep.subr.bf16.mxu0 0
    %287 = vmatpush1.bf16.msra.mxu0 0
    %288 = vmatprep.subr.bf16.mxu0 0
    %289 = vmatpush1.bf16.msra.mxu0 0
    %290 = vmatprep.subr.bf16.mxu0 0
    %291 = vmatpush1.bf16.msra.mxu0 %v228
    %292 = vmatprep.subr.bf16.mxu0 0
    %293 = vmatpush2.bf16.msra.mxu0 0
    %294 = vmatprep.subr.bf16.mxu0 0
    %295 = vmatpush2.bf16.msra.mxu0 0
    %296 = vmatprep.subr.bf16.mxu0 0
    %297 = vmatpush2.bf16.msra.mxu0 0
    %298 = vmatprep.subr.bf16.mxu0 0
    %299 = vmatpush2.bf16.msra.mxu0 0
    %300 = vmatprep.subr.bf16.mxu0 0
    %301 = vmatpush2.bf16.msra.mxu0 0
    %302 = vmatprep.subr.bf16.mxu0 0
    %303 = vmatpush2.bf16.msra.mxu0 0
    %304 = vmatprep.subr.bf16.mxu0 0
    %305 = vmatpush2.bf16.msra.mxu0 0
    %306 = vmatprep.subr.bf16.mxu0 0
    %307 = vmatpush2.bf16.msra.mxu0 0
    %308 = vmatprep.mubr.bf16.mxu0 0
    %309 = vmatmul.mubr.bf16.gmra.mxu0 %v274
    %v310 = vpop.f32.mrf.mxu0
    %v311 = vadd.f32 0.0, %v310
    %v312 = vpop.f32.mrf.mxu0
    %v313 = vpop.f32.mrf.mxu0
    %v314 = vadd.f32 0.0, %v313
    %v315 = vpop.f32.mrf.mxu0
    %316 = vdwg.mxu0
    %317 = vset.pattern.permute.xlu0 19
    %318 = vperm.xlu0 %317, %v56
    %v319 = vpop.permute.xlu0 %318
    %321 = vset.pattern.permute.xlu0 19
    %322 = vperm.xlu0 %321, %v57
    %v323 = vpop.permute.xlu0 %322
    %325 = vset.pattern.permute.xlu0 19
    %326 = vperm.xlu0 %325, %v58
    %v327 = vpop.permute.xlu0 %326
    %329 = vset.pattern.permute.xlu0 19
    %330 = vperm.xlu0 %329, %v59
    %v331 = vpop.permute.xlu0 %330
    %v333 = vlaneseq
    %v334 = vshrl.u32 %v333, 7
    %v335 = vsub.s32 1, %v334
    %v336 = vrot.slane %v92, %v335
    %v337 = vlaneseq
    %v338 = vshrl.u32 %v337, 7
    %v339 = vsub.s32 1, %v338
    %v340 = vrot.slane %v124, %v339
    %v341 = vadd.f32 %v319, %v336
    %v342 = vadd.f32 %v323, %v336
    %v343 = vadd.f32 %v327, %v340
    %v344 = vadd.f32 %v331, %v340
    %vm345 = vcmp.gt.f32.partialorder %v341, 0.0
    %vm346 = vcmp.gt.f32.partialorder %v342, 0.0
    %vm347 = vcmp.gt.f32.partialorder %v343, 0.0
    %vm348 = vcmp.gt.f32.partialorder %v344, 0.0
    %v349 = vmul.f32 %v341, 0.2
    %v350 = vmul.f32 %v342, 0.2
    %v351 = vmul.f32 %v343, 0.2
    %v352 = vmul.f32 %v344, 0.2
    %v353 = vsel %vm345, %v341, %v349
    %v354 = vsel %vm346, %v342, %v350
    %v355 = vsel %vm347, %v343, %v351
    %v356 = vsel %vm348, %v344, %v352
    %v357 = vsel %vm180, %v353, -inf
    %358 = vmax.xlane.f32.xlu0 %v357
    %v359 = vpop.xlane.xlu0 %358
    %v360 = vsel %vm180, %v354, -inf
    %361 = vmax.xlane.f32.xlu0 %v360
    %v362 = vpop.xlane.xlu0 %361
    %v363 = vsel %vm180, %v355, -inf
    %364 = vmax.xlane.f32.xlu0 %v363
    %v365 = vpop.xlane.xlu0 %364
    %v366 = vsel %vm180, %v356, -inf
    %367 = vmax.xlane.f32.xlu0 %v366
    %v368 = vpop.xlane.xlu0 %367
    %v369 = vsub.f32 %v353, %v359
    %v370 = vsub.f32 %v354, %v362
    %v371 = vsub.f32 %v355, %v365
    %v372 = vsub.f32 %v356, %v368
    %v373 = vmul.f32 %v369, 1.442695
    %v374 = vpow.pop %v373
    %v375 = vmul.f32 %v370, 1.442695
    %v376 = vpow.pop %v375
    %v377 = vmul.f32 %v371, 1.442695
    %v378 = vpow.pop %v377
    %v379 = vmul.f32 %v372, 1.442695
    %v380 = vpow.pop %v379
    %v381 = vsel %vm180, %v374, 0.0
    %382 = vadd.xlane.f32.xlu0 %v381
    %v383 = vpop.xlane.xlu0 %382
    %v384 = vsel %vm180, %v376, 0.0
    %385 = vadd.xlane.f32.xlu0 %v384
    %v386 = vpop.xlane.xlu0 %385
    %v387 = vsel %vm180, %v378, 0.0
    %388 = vadd.xlane.f32.xlu0 %v387
    %v389 = vpop.xlane.xlu0 %388
    %v390 = vsel %vm180, %v380, 0.0
    %391 = vadd.xlane.f32.xlu0 %v390
    %v392 = vpop.xlane.xlu0 %391
    %v393 = vrcp.pop %v383
    %v394 = vrcp.pop %v386
    %v395 = vrcp.pop %v389
    %v396 = vrcp.pop %v392
    %v397 = vmul.f32 %v374, %v393
    %v398 = vmul.f32 %v376, %v394
    %v399 = vmul.f32 %v378, %v395
    %v400 = vmul.f32 %v380, %v396
    %v401 = vpack.c.bf16 %v398, %v397
    %v402 = vpack.c.bf16 %v400, %v399
    %404 = vrot.lane.b32.xlu0 %v227, 120
    %v405 = vpop.permute.xlu0 %404
    %v408 = vsel %vm180, %v401, 0
    %410 = vmatprep.subr.bf16.mxu0 0
    %411 = vmatpush1.bf16.msra.mxu0 0
    %412 = vmatprep.subr.bf16.mxu0 0
    %413 = vmatpush1.bf16.msra.mxu0 0
    %414 = vmatprep.subr.bf16.mxu0 0
    %415 = vmatpush1.bf16.msra.mxu0 0
    %416 = vmatprep.subr.bf16.mxu0 0
    %417 = vmatpush1.bf16.msra.mxu0 0
    %418 = vmatprep.subr.bf16.mxu0 0
    %419 = vmatpush1.bf16.msra.mxu0 0
    %420 = vmatprep.subr.bf16.mxu0 0
    %421 = vmatpush1.bf16.msra.mxu0 0
    %422 = vmatprep.subr.bf16.mxu0 0
    %423 = vmatpush1.bf16.msra.mxu0 0
    %424 = vmatprep.subr.bf16.mxu0 0
    %425 = vmatpush1.bf16.msra.mxu0 %v405
    %426 = vmatprep.subr.bf16.mxu0 0
    %427 = vmatpush2.bf16.msra.mxu0 0
    %428 = vmatprep.subr.bf16.mxu0 0
    %429 = vmatpush2.bf16.msra.mxu0 0
    %430 = vmatprep.subr.bf16.mxu0 0
    %431 = vmatpush2.bf16.msra.mxu0 0
    %432 = vmatprep.subr.bf16.mxu0 0
    %433 = vmatpush2.bf16.msra.mxu0 0
    %434 = vmatprep.subr.bf16.mxu0 0
    %435 = vmatpush2.bf16.msra.mxu0 0
    %436 = vmatprep.subr.bf16.mxu0 0
    %437 = vmatpush2.bf16.msra.mxu0 0
    %438 = vmatprep.subr.bf16.mxu0 0
    %439 = vmatpush2.bf16.msra.mxu0 0
    %440 = vmatprep.subr.bf16.mxu0 0
    %441 = vmatpush2.bf16.msra.mxu0 0
    %442 = vmatprep.mubr.bf16.mxu0 0
    %443 = vmatmul.mubr.bf16.gmra.mxu0 %v408
    %v444 = vpop.f32.mrf.mxu0
    %v445 = vadd.f32 0.0, %v444
    %v446 = vpop.f32.mrf.mxu0
    %v447 = vpop.f32.mrf.mxu0
    %v448 = vadd.f32 0.0, %v447
    %v449 = vpop.f32.mrf.mxu0
    %450 = vdwg.mxu0
    %452 = vrot.lane.b32.xlu0 %v228, 120
    %v453 = vpop.permute.xlu0 %452
    %v456 = vsel %vm180, %v402, 0
    %458 = vmatprep.subr.bf16.mxu0 0
    %459 = vmatpush1.bf16.msra.mxu0 0
    %460 = vmatprep.subr.bf16.mxu0 0
    %461 = vmatpush1.bf16.msra.mxu0 0
    %462 = vmatprep.subr.bf16.mxu0 0
    %463 = vmatpush1.bf16.msra.mxu0 0
    %464 = vmatprep.subr.bf16.mxu0 0
    %465 = vmatpush1.bf16.msra.mxu0 0
    %466 = vmatprep.subr.bf16.mxu0 0
    %467 = vmatpush1.bf16.msra.mxu0 0
    %468 = vmatprep.subr.bf16.mxu0 0
    %469 = vmatpush1.bf16.msra.mxu0 0
    %470 = vmatprep.subr.bf16.mxu0 0
    %471 = vmatpush1.bf16.msra.mxu0 0
    %472 = vmatprep.subr.bf16.mxu0 0
    %473 = vmatpush1.bf16.msra.mxu0 %v453
    %474 = vmatprep.subr.bf16.mxu0 0
    %475 = vmatpush2.bf16.msra.mxu0 0
    %476 = vmatprep.subr.bf16.mxu0 0
    %477 = vmatpush2.bf16.msra.mxu0 0
    %478 = vmatprep.subr.bf16.mxu0 0
    %479 = vmatpush2.bf16.msra.mxu0 0
    %480 = vmatprep.subr.bf16.mxu0 0
    %481 = vmatpush2.bf16.msra.mxu0 0
    %482 = vmatprep.subr.bf16.mxu0 0
    %483 = vmatpush2.bf16.msra.mxu0 0
    %484 = vmatprep.subr.bf16.mxu0 0
    %485 = vmatpush2.bf16.msra.mxu0 0
    %486 = vmatprep.subr.bf16.mxu0 0
    %487 = vmatpush2.bf16.msra.mxu0 0
    %488 = vmatprep.subr.bf16.mxu0 0
    %489 = vmatpush2.bf16.msra.mxu0 0
    %490 = vmatprep.mubr.bf16.mxu0 0
    %491 = vmatmul.mubr.bf16.gmra.mxu0 %v456
    %v492 = vpop.f32.mrf.mxu0
    %v493 = vadd.f32 0.0, %v492
    %v494 = vpop.f32.mrf.mxu0
    %v495 = vpop.f32.mrf.mxu0
    %v496 = vadd.f32 0.0, %v495
    %v497 = vpop.f32.mrf.mxu0
    %498 = vdwg.mxu0
    %503 = vrot.lane.b32.xlu0 %v445, 8
    %v504 = vpop.permute.xlu0 %503
    %505 = vrot.lane.b32.xlu0 %v448, 8
    %v506 = vpop.permute.xlu0 %505
    %507 = vrot.lane.b32.xlu0 %v493, 8
    %v508 = vpop.permute.xlu0 %507
    %509 = vrot.lane.b32.xlu0 %v496, 8
    %v510 = vpop.permute.xlu0 %509
    %vm515 = vcmask 64512
    %v516 = vsel %vm515, %v267, %v504
    %v517 = vsel %vm515, %v270, %v506
    %v518 = vsel %vm515, %v311, %v508
    %v519 = vsel %vm515, %v314, %v510
    %v520 = vld [vmem:[%s2] sm:$0x1]
    %v522 = vlaneseq
    %v523 = vshrl.u32 %v522, 7
    %v524 = vsub.s32 0, %v523
    %v525 = vrot.slane %v520, %v524
    %v527 = vadd.f32 %v516, %v525
    %v528 = vadd.f32 %v517, %v525
    %v529 = vadd.f32 %v518, %v525
    %v530 = vadd.f32 %v519, %v525
    %v531 = vmax.f32 %v527, 0.0
    %v532 = vmax.f32 %v528, 0.0
    %v533 = vmax.f32 %v529, 0.0
    %v534 = vmax.f32 %v530, 0.0
    %v535 = vsel %vm180, %v531, 0.0
    %v536 = vsel %vm180, %v532, 0.0
    %v537 = vadd.f32 %v535, %v536
    %v538 = vsel %vm180, %v533, 0.0
    %v539 = vadd.f32 %v537, %v538
    %v540 = vsel %vm180, %v534, 0.0
    %v541 = vadd.f32 %v539, %v540
    %v542 = vrot.slane %v541, 4
    %v543 = vadd.f32 %v541, %v542
    %v544 = vrot.slane %v543, 2
    %v545 = vadd.f32 %v543, %v544
    %v546 = vrot.slane %v545, 1
    %v547 = vadd.f32 %v545, %v546
    %v548 = vrcp.pop 32.0
    %v549 = vmul.f32 %v547, %v548
    %v550 = vsub.f32 %v531, %v549
    %v551 = vsub.f32 %v532, %v549
    %v552 = vsub.f32 %v533, %v549
    %v553 = vsub.f32 %v534, %v549
    %v554 = vmul.f32 %v550, %v550
    %v555 = vmul.f32 %v551, %v551
    %v556 = vmul.f32 %v552, %v552
    %v557 = vmul.f32 %v553, %v553
    %v558 = vsel %vm180, %v554, 0.0
    %v559 = vsel %vm180, %v555, 0.0
    %v560 = vadd.f32 %v558, %v559
    %v561 = vsel %vm180, %v556, 0.0
    %v562 = vadd.f32 %v560, %v561
    %v563 = vsel %vm180, %v557, 0.0
    %v564 = vadd.f32 %v562, %v563
    %v565 = vrot.slane %v564, 4
    %v566 = vadd.f32 %v564, %v565
    %v567 = vrot.slane %v566, 2
    %v568 = vadd.f32 %v566, %v567
    %v569 = vrot.slane %v568, 1
    %v570 = vadd.f32 %v568, %v569
    %v571 = vmul.f32 %v570, %v548
    %v572 = vld [vmem:[%s3] sm:$0x1]
    %v574 = vlaneseq
    %v575 = vshrl.u32 %v574, 7
    %v576 = vsub.s32 0, %v575
    %v577 = vrot.slane %v572, %v576
    %v579 = vmul.f32 %v577, %v550
    %v580 = vmul.f32 %v577, %v551
    %v581 = vmul.f32 %v577, %v552
    %v582 = vmul.f32 %v577, %v553
    %v583 = vadd.f32 %v571, 1e-05
    %v584 = vrsqrt.pop %v583
    %v585 = vmul.f32 %v579, %v584
    %v586 = vmul.f32 %v580, %v584
    %v587 = vmul.f32 %v581, %v584
    %v588 = vmul.f32 %v582, %v584
    %v589 = vld [vmem:[%s4] sm:$0x1]
    %v591 = vlaneseq
    %v592 = vshrl.u32 %v591, 7
    %v593 = vsub.s32 0, %v592
    %v594 = vrot.slane %v589, %v593
    %v596 = vadd.f32 %v585, %v594
    %v597 = vadd.f32 %v586, %v594
    %v598 = vadd.f32 %v587, %v594
    %v599 = vadd.f32 %v588, %v594
    %v600 = vld [vmem:[%s5] sm:$0x1]
    %v601 = vmul.f32 %v600, %v600
    %vm602 = vcmask 122880
    %v603 = vsel %vm602, %v601, 0.0
    %604 = vadd.xlane.f32.xlu0 %v603
    %v605 = vpop.xlane.xlu0 %604
    %v606 = vrot.slane %v605, 4
    %v607 = vadd.f32 %v605, %v606
    %v608 = vrot.slane %v607, 2
    %v609 = vadd.f32 %v607, %v608
    %v610 = vrot.slane %v609, 1
    %v611 = vadd.f32 %v609, %v610
    %s612 = vtos %v611
    %v613 = vstv %s612
    %v614 = vrsqrt.pop %v613
    %s615 = vtos %v614
    %v616 = vstv %s615
    %v617 = vmul.f32 %v600, %v616
    %v619 = vlaneseq
    %v620 = vshrl.u32 %v619, 7
    %v621 = vsub.s32 0, %v620
    %v622 = vrot.slane %v617, %v621
    %v624 = vmul.f32 %v596, %v622
    %v625 = vmul.f32 %v597, %v622
    %v626 = vmul.f32 %v598, %v622
    %v627 = vmul.f32 %v599, %v622
    %v628 = vsel %vm180, %v624, 0.0
    %629 = vadd.xlane.f32.xlu0 %v628
    %v630 = vpop.xlane.xlu0 %629
    %v631 = vsel %vm180, %v625, 0.0
    %632 = vadd.xlane.f32.xlu0 %v631
    %v633 = vpop.xlane.xlu0 %632
    %v634 = vsel %vm180, %v626, 0.0
    %635 = vadd.xlane.f32.xlu0 %v634
    %v636 = vpop.xlane.xlu0 %635
    %v637 = vsel %vm180, %v627, 0.0
    %638 = vadd.xlane.f32.xlu0 %v637
    %v639 = vpop.xlane.xlu0 %638
    %v640 = vtanh.pop %v630
    %v641 = vtanh.pop %v633
    %v642 = vtanh.pop %v636
    %v643 = vtanh.pop %v639
    %v644 = vsel %vm180, %v596, %v640
    %v645 = vsel %vm180, %v597, %v641
    %v646 = vsel %vm180, %v598, %v642
    %v647 = vsel %vm180, %v599, %v643
    %vm648 = vcmask 138240
    %649 = vst.msk [vmem:[#allocation2] sm:$0xff] %vm648, %v644
    %650 = vst.msk [vmem:[#allocation2 + $0x8] sm:$0xff] %vm648, %v645
    %651 = vst.msk [vmem:[#allocation2 + $0x10] sm:$0xff] %vm648, %v646
    %652 = vst.msk [vmem:[#allocation2 + $0x18] sm:$0xff] %vm648, %v647
    // Predicated region
    $region26: #{tpu_custom_call.1} parent=1 // pred_check
      _
    $region27: #{tpu_custom_call.1} parent=1 // pred_check_branch
      %654 = sbr.rel (0) target = $region29
    $region28: #{tpu_custom_call.1} parent=1 // pred_region
      %s656 = ssub.s32 512, 512
      %657 = vsyncadd [#allocation3], %s656
      %s658 = sshll.u32 [#allocation2], 4
      %s659 = int_to_ptr.vmem [resolvable:$true] %s658
      %664 = dma.vmem_to_hbm [thread:$0]  %s659, 512, %s6, [#allocation3], 128, 128, 8
    $region29: #{tpu_custom_call.1} parent=1 // pred_fallthru
      _
    // Predicated region
    $region30: #{tpu_custom_call.1} parent=1 // pred_check
      _
    $region31: #{tpu_custom_call.1} parent=1 // pred_check_branch
      %666 = sbr.rel (0) target = $region33
    $region32: #{tpu_custom_call.1} parent=1 // pred_region
      %667 = dma.done [#allocation3], 512
    $region33: #{tpu_custom_call.1} parent=1 // pred_fallthru
      _
    %668 = vsyncpa [#allocation3], 1

</llo_original>
